<compile_context>
chip_gen: v7x
topology: tpu7x:2x2x1
jax: 0.10.0
libtpu: 0.0.40
codegen_flags: <defaults>
</compile_context>

<pallas_src>
import functools
import math

import jax
import jax.numpy as jnp
from jax.experimental import pallas as pl
from jax.experimental.pallas import tpu as pltpu


def _transform_kernel(inv_ref, off_ref, x_ref, wh_ref, wwt_ref, rsh_ref, rsw_ref,
                      o_ref, *, order_a):
    c = pl.program_id(1)
    inv_s = inv_ref[c]          # 1 / std[c]          (host precomputed)
    off = off_ref[c]            # mean[c] / std[c]    (host precomputed)

    x = x_ref[0, 0].astype(jnp.bfloat16)                        # (h, w)
    if order_a:
        # (Wh_strip @ x) @ Ww^T  -> one output-row strip
        tmp = jnp.dot(wh_ref[...], x, preferred_element_type=jnp.float32)
        res = jnp.dot(tmp.astype(jnp.bfloat16), wwt_ref[...],
                      preferred_element_type=jnp.float32)       # (TH, w_pad)
    else:
        # Wh @ (x @ Ww^T_strip)  -> one output-column strip
        tmp = jnp.dot(x, wwt_ref[...], preferred_element_type=jnp.float32)
        res = jnp.dot(wh_ref[...], tmp.astype(jnp.bfloat16),
                      preferred_element_type=jnp.float32)       # (h_pad, TW)

    # rs_h (x) rs_w == resize(ones): 1 inside the resized extent, 0 in the
    # padding, so the folded normalization offset never touches the zeros.
    valid = rsh_ref[...] * rsw_ref[...]
    o_ref[0, 0] = res * inv_s - off * valid


def _bilinear_matrix(in_size, out_size, out_pad):
    """(out_pad, in_size) bilinear interp matrix; rows >= out_size are zero.

    Coordinate mapping follows F.interpolate(mode='bilinear',
    align_corners=False) with recompute_scale_factor semantics, i.e. uses the
    in/out size ratio (not the pre-floor scale factor).
    """
    ratio = in_size / out_size
    dst = jnp.arange(out_size, dtype=jnp.float32)
    src = jnp.maximum(ratio * (dst + 0.5) - 0.5, 0.0)
    i0 = jnp.clip(jnp.floor(src).astype(jnp.int32), 0, in_size - 1)
    i1 = jnp.minimum(i0 + 1, in_size - 1)
    lam = jnp.clip(src - i0.astype(jnp.float32), 0.0, 1.0)
    lam = jnp.where(i1 == i0, 0.0, lam)       # exact weight at clamped edge
    rows = jnp.arange(out_size)
    wmat = jnp.zeros((out_size, in_size), dtype=jnp.float32)
    wmat = wmat.at[rows, i0].add(1.0 - lam)
    wmat = wmat.at[rows, i1].add(lam)
    return jnp.pad(wmat, ((0, out_pad - out_size), (0, 0)))


class GeneralizedRCNNTransformPallas:
    """Eval-mode forward of GeneralizedRCNNTransform (size = min_size[-1])."""

    def __init__(self, min_size, max_size, image_mean, image_std):
        if not isinstance(min_size, (list, tuple)):
            min_size = (min_size,)
        self.min_size = min_size
        self.max_size = max_size
        self.image_mean = jnp.asarray(image_mean, dtype=jnp.float32)
        self.image_std = jnp.asarray(image_std, dtype=jnp.float32)

    def __call__(self, images, targets=None, size_divisible=32):
        # images: (N, C, H, W) float32; synthetic batch => equal-sized images,
        # so batch_images() padding is identical for every image.
        # TODO(synk): per-image heterogeneous sizes (ragged batch_images) are not
        # expressible with one static grid; equal-sized inputs assumed.
        n, c, h, w = images.shape

        # resize() scale-factor logic (eval mode), static in Python.
        size = float(self.min_size[-1])
        min_side, max_side = float(min(h, w)), float(max(h, w))
        scale = size / min_side
        if max_side * scale > self.max_size:
            scale = self.max_size / max_side
        out_h = int(math.floor(h * scale))
        out_w = int(math.floor(w * scale))
        h_pad = int(math.ceil(out_h / size_divisible) * size_divisible)
        w_pad = int(math.ceil(out_w / size_divisible) * size_divisible)

        # Interpolation matrices (bf16 for the MXU); Ww pre-transposed on host.
        # TODO(synk): exploit the 2-nonzeros-per-row banded structure via
        # scalar-prefetched band offsets to shrink the first matmul's K dim.
        wh = _bilinear_matrix(h, out_h, h_pad).astype(jnp.bfloat16)      # (h_pad, h)
        wwt = _bilinear_matrix(w, out_w, w_pad).astype(jnp.bfloat16).T   # (w, w_pad)
        rs_h = jnp.sum(wh.astype(jnp.float32), axis=1, keepdims=True)    # (h_pad, 1)
        rs_w = jnp.sum(wwt.astype(jnp.float32), axis=0, keepdims=True)   # (1, w_pad)

        inv_std = (1.0 / self.image_std).astype(jnp.float32)             # (C,)
        offset = (self.image_mean * inv_std).astype(jnp.float32)         # (C,)

        # Trace-time matmul order: A = (Wh @ x) @ Ww^T,  B = Wh @ (x @ Ww^T).
        cost_a = h_pad * w * (h + w_pad)
        cost_b = h * w_pad * (w + h_pad)
        order_a = cost_a <= cost_b

        if order_a:
            tile = h_pad if h_pad <= 256 else 256        # rows (multiple of 8)
            ntiles = (h_pad + tile - 1) // tile
            wh_spec = pl.BlockSpec((tile, h), lambda i, j, k: (k, 0))
            wwt_spec = pl.BlockSpec((w, w_pad), lambda i, j, k: (0, 0))
            rsh_spec = pl.BlockSpec((tile, 1), lambda i, j, k: (k, 0))
            rsw_spec = pl.BlockSpec((1, w_pad), lambda i, j, k: (0, 0))
            out_spec = pl.BlockSpec((1, 1, tile, w_pad),
                                    lambda i, j, k: (i, j, k, 0))
            blk_h, blk_w = tile, w_pad
        else:
            tile = w_pad if w_pad <= 256 else 256        # cols (x128 or full)
            ntiles = (w_pad + tile - 1) // tile
            wh_spec = pl.BlockSpec((h_pad, h), lambda i, j, k: (0, 0))
            wwt_spec = pl.BlockSpec((w, tile), lambda i, j, k: (0, k))
            rsh_spec = pl.BlockSpec((h_pad, 1), lambda i, j, k: (0, 0))
            rsw_spec = pl.BlockSpec((1, tile), lambda i, j, k: (0, k))
            out_spec = pl.BlockSpec((1, 1, h_pad, tile),
                                    lambda i, j, k: (i, j, 0, k))
            blk_h, blk_w = h_pad, tile

        # Explicit VMEM budget from the real block sizes (2x double buffering)
        # plus in-kernel temporaries; capped under v7x's 64 MiB physical VMEM.
        x_b = h * w * 4
        wh_b = (tile if order_a else h_pad) * h * 2
        ww_b = w * (w_pad if order_a else tile) * 2
        rs_b = (blk_h + blk_w) * 4
        out_b = blk_h * blk_w * 4
        need = 2 * (x_b + wh_b + ww_b + rs_b + out_b) + x_b // 2 + 3 * out_b
        vmem_limit = int(min(max(need + (8 << 20), 16 << 20), 56 << 20))

        kernel = functools.partial(_transform_kernel, order_a=order_a)

        batched = pl.pallas_call(
            kernel,
            out_shape=jax.ShapeDtypeStruct((n, c, h_pad, w_pad), jnp.float32),
            grid=(n, c, ntiles),
            in_specs=[
                pl.BlockSpec(memory_space=pltpu.SMEM),                      # inv_std (C,)
                pl.BlockSpec(memory_space=pltpu.SMEM),                      # mean/std (C,)
                pl.BlockSpec((1, 1, h, w), lambda i, j, k: (i, j, 0, 0)),   # image plane
                wh_spec,                                                    # Wh (bf16)
                wwt_spec,                                                   # Ww^T (bf16)
                rsh_spec,                                                   # row sums
                rsw_spec,                                                   # col sums
            ],
            out_specs=out_spec,
            compiler_params=pltpu.CompilerParams(
                dimension_semantics=("parallel", "parallel", "parallel"),
                vmem_limit_bytes=vmem_limit),
        )(inv_std, offset, images, wh, wwt, rs_h, rs_w)

        image_sizes = [(out_h, out_w)] * n

        # Glue: box rescaling of targets (module spec uses the uniform scale).
        if targets is not None:
            targets = [dict(t, boxes=t["boxes"] * scale) for t in targets]

        # TODO(synk): output last dim is only /32-aligned (batch_images semantics);
        # padding w_pad to a multiple of 128 would make stores lane-dense but
        # changes the module's output shape.
        return (batched, image_sizes), targets


if __name__ == "__main__":
    key = jax.random.PRNGKey(0)
    N, C, H, W = 2, 3, 16, 16
    images = jax.random.uniform(key, (N, C, H, W), dtype=jnp.float32)

    transform = GeneralizedRCNNTransformPallas(
        min_size=24, max_size=32,
        image_mean=[0.485, 0.456, 0.406],
        image_std=[0.229, 0.224, 0.225],
    )

    (batched, image_sizes), _ = transform(images)
    batched = jax.block_until_ready(batched)

    # Basic sanity: shape, finiteness, and exact zero padding outside the
    # resized region (matches torch batch_images zero fill).
    out_h, out_w = image_sizes[0]
    assert batched.shape == (N, C, 32, 32), batched.shape
    assert bool(jnp.all(jnp.isfinite(batched)))
    assert float(jnp.abs(batched[:, :, out_h:, :]).max()) == 0.0
    assert float(jnp.abs(batched[:, :, :, out_w:]).max()) == 0.0

    print("KERNEL_OK")
</pallas_src>

<mosaic_0001>
module attributes {stable_mosaic.version = 11 : i64} {
  func.func @_transform_kernel(%arg0: i32, %arg1: i32, %arg2: i32, %arg3: memref<3xf32, #tpu.memory_space<smem>>, %arg4: memref<3xf32, #tpu.memory_space<smem>>, %arg5: memref<1x1x16x16xf32, #tpu.memory_space<vmem>>, %arg6: memref<32x16xbf16, #tpu.memory_space<vmem>>, %arg7: memref<16x32xbf16, #tpu.memory_space<vmem>>, %arg8: memref<32x1xf32, #tpu.memory_space<vmem>>, %arg9: memref<1x32xf32, #tpu.memory_space<vmem>>, %arg10: memref<1x1x32x32xf32, #tpu.memory_space<vmem>>) attributes {dimension_semantics = [#tpu.dimension_semantics<parallel>, #tpu.dimension_semantics<parallel>, #tpu.dimension_semantics<parallel>], iteration_bounds = array<i64: 2, 3, 1>, scalar_prefetch = 0 : i64, scratch_operands = 0 : i64, tpu.core_type = #tpu.core_type<tc>, window_params = [{transform_indices = @transform_0, window_bounds = array<i64: 3>}, {transform_indices = @transform_1, window_bounds = array<i64: 3>}, {transform_indices = @transform_2, window_bounds = array<i64: 1, 1, 16, 16>}, {transform_indices = @transform_3, window_bounds = array<i64: 32, 16>}, {pipeline_mode = #tpu.pipeline_mode<synchronous>, transform_indices = @transform_4, window_bounds = array<i64: 16, 32>}, {transform_indices = @transform_5, window_bounds = array<i64: 32, 1>}, {pipeline_mode = #tpu.pipeline_mode<synchronous>, transform_indices = @transform_6, window_bounds = array<i64: 1, 32>}, {transform_indices = @transform_7, window_bounds = array<i64: 1, 1, 32, 32>}]} {
    %0 = arith.index_cast %arg1 : i32 to index
    %1 = memref.load %arg3[%0] : memref<3xf32, #tpu.memory_space<smem>>
    %2 = arith.index_cast %arg1 : i32 to index
    %3 = memref.load %arg4[%2] : memref<3xf32, #tpu.memory_space<smem>>
    %c0 = arith.constant 0 : index
    %c0_0 = arith.constant 0 : index
    %c0_1 = arith.constant 0 : index
    %c0_2 = arith.constant 0 : index
    %4 = vector.load %arg5[%c0, %c0_0, %c0_1, %c0_2] : memref<1x1x16x16xf32, #tpu.memory_space<vmem>>, vector<1x1x16x16xf32>
    %5 = vector.shape_cast %4 : vector<1x1x16x16xf32> to vector<16x16xf32>
    %6 = arith.truncf %5 : vector<16x16xf32> to vector<16x16xbf16>
    %c0_3 = arith.constant 0 : index
    %c0_4 = arith.constant 0 : index
    %7 = vector.load %arg6[%c0_3, %c0_4] : memref<32x16xbf16, #tpu.memory_space<vmem>>, vector<32x16xbf16>
    %cst = arith.constant dense<0.000000e+00> : vector<32x16xf32>
    %8 = tpu.matmul %7, %6, %cst {dimension_numbers = #tpu.dot_dimension_numbers<[1], [0], [0], [1], [0, 0, 1, 1], [], []>} : vector<32x16xbf16>, vector<16x16xbf16>, vector<32x16xf32> -> vector<32x16xf32>
    %9 = arith.truncf %8 : vector<32x16xf32> to vector<32x16xbf16>
    %c0_5 = arith.constant 0 : index
    %c0_6 = arith.constant 0 : index
    %10 = vector.load %arg7[%c0_5, %c0_6] : memref<16x32xbf16, #tpu.memory_space<vmem>>, vector<16x32xbf16>
    %cst_7 = arith.constant dense<0.000000e+00> : vector<32x32xf32>
    %11 = tpu.matmul %9, %10, %cst_7 {dimension_numbers = #tpu.dot_dimension_numbers<[1], [0], [0], [1], [0, 0, 1, 1], [], []>} : vector<32x16xbf16>, vector<16x32xbf16>, vector<32x32xf32> -> vector<32x32xf32>
    %c0_8 = arith.constant 0 : index
    %c0_9 = arith.constant 0 : index
    %12 = vector.load %arg8[%c0_8, %c0_9] : memref<32x1xf32, #tpu.memory_space<vmem>>, vector<32x1xf32>
    %c0_10 = arith.constant 0 : index
    %c0_11 = arith.constant 0 : index
    %13 = vector.load %arg9[%c0_10, %c0_11] : memref<1x32xf32, #tpu.memory_space<vmem>>, vector<1x32xf32>
    %14 = vector.broadcast %12 : vector<32x1xf32> to vector<32x32xf32>
    %15 = vector.broadcast %13 : vector<1x32xf32> to vector<32x32xf32>
    %16 = arith.mulf %14, %15 : vector<32x32xf32>
    %17 = vector.broadcast %1 : f32 to vector<32x32xf32>
    %18 = arith.mulf %11, %17 : vector<32x32xf32>
    %19 = vector.broadcast %3 : f32 to vector<32x32xf32>
    %20 = arith.mulf %19, %16 : vector<32x32xf32>
    %21 = arith.subf %18, %20 : vector<32x32xf32>
    %c0_12 = arith.constant 0 : index
    %c0_13 = arith.constant 0 : index
    %c0_14 = arith.constant 0 : index
    %c0_15 = arith.constant 0 : index
    %22 = vector.load %arg10[%c0_12, %c0_13, %c0_14, %c0_15] : memref<1x1x32x32xf32, #tpu.memory_space<vmem>>, vector<1x1x32x32xf32>
    %23 = vector.shape_cast %22 : vector<1x1x32x32xf32> to vector<32x32xf32>
    %24 = vector.shape_cast %21 : vector<32x32xf32> to vector<1x1x32x32xf32>
    tpu.vector_store %arg10[%c0_12, %c0_13, %c0_14, %c0_15], %24 {strides = array<i32>} : memref<1x1x32x32xf32, #tpu.memory_space<vmem>>, vector<1x1x32x32xf32>,
    return
  }
  func.func @transform_0(%arg0: i32, %arg1: i32, %arg2: i32) -> i32 {
    %c0_i32 = arith.constant 0 : i32
    %c0_i32_0 = arith.constant 0 : i32
    return %c0_i32 : i32
  }
  func.func @transform_1(%arg0: i32, %arg1: i32, %arg2: i32) -> i32 {
    %c0_i32 = arith.constant 0 : i32
    %c0_i32_0 = arith.constant 0 : i32
    return %c0_i32 : i32
  }
  func.func @transform_2(%arg0: i32, %arg1: i32, %arg2: i32) -> (i32, i32, i32, i32) {
    %c0_i32 = arith.constant 0 : i32
    %c0_i32_0 = arith.constant 0 : i32
    %c0_i32_1 = arith.constant 0 : i32
    return %arg0, %arg1, %c0_i32, %c0_i32_0 : i32, i32, i32, i32
  }
  func.func @transform_3(%arg0: i32, %arg1: i32, %arg2: i32) -> (i32, i32) {
    %c0_i32 = arith.constant 0 : i32
    %c0_i32_0 = arith.constant 0 : i32
    return %arg2, %c0_i32 : i32, i32
  }
  func.func @transform_4(%arg0: i32, %arg1: i32, %arg2: i32) -> (i32, i32) {
    %c0_i32 = arith.constant 0 : i32
    %c0_i32_0 = arith.constant 0 : i32
    %c0_i32_1 = arith.constant 0 : i32
    return %c0_i32, %c0_i32_0 : i32, i32
  }
  func.func @transform_5(%arg0: i32, %arg1: i32, %arg2: i32) -> (i32, i32) {
    %c0_i32 = arith.constant 0 : i32
    %c0_i32_0 = arith.constant 0 : i32
    return %arg2, %c0_i32 : i32, i32
  }
  func.func @transform_6(%arg0: i32, %arg1: i32, %arg2: i32) -> (i32, i32) {
    %c0_i32 = arith.constant 0 : i32
    %c0_i32_0 = arith.constant 0 : i32
    %c0_i32_1 = arith.constant 0 : i32
    return %c0_i32, %c0_i32_0 : i32, i32
  }
  func.func @transform_7(%arg0: i32, %arg1: i32, %arg2: i32) -> (i32, i32, i32, i32) {
    %c0_i32 = arith.constant 0 : i32
    %c0_i32_0 = arith.constant 0 : i32
    return %arg0, %arg1, %arg2, %c0_i32 : i32, i32, i32, i32
  }
}

</mosaic_0001>

<llo_original>
// kernel: tpu_custom_call.1
$region0: #{tpu_custom_call.1}
  #allocation0 [shape = 'u32[]', space=smem, size = 0x4, offset = 0x4, fixed_abs, tag = 'smem constant byte address 0x4 - core index']
  #allocation1 [shape = 'u32[144,128]{1,0:T(1,128)}', space=vmem, size = 0x12000, scoped, tag = 'internal scratch']
  %s0 = inlined_call_operand.vmem [shape: f32[3], index: 0, kind: input, shape index: {}]
  %s1 = inlined_call_operand.vmem [shape: f32[3], index: 1, kind: input, shape index: {}]
  %s2 = inlined_call_operand.hbm [shape: f32[2,3,16,16], index: 2, kind: input, shape index: {}]
  %s3 = inlined_call_operand.vmem [shape: bf16[32,16], index: 3, kind: input, shape index: {}]
  %s4 = inlined_call_operand.vmem [shape: bf16[16,32], index: 4, kind: input, shape index: {}]
  %s5 = inlined_call_operand.vmem [shape: f32[32,1], index: 5, kind: input, shape index: {}]
  %s6 = inlined_call_operand.vmem [shape: f32[1,32], index: 6, kind: input, shape index: {}]
  %s7 = inlined_call_operand.hbm [shape: f32[2,3,32,32], index: 7, kind: output, shape index: {}]
  %s8 = sld [smem:[#allocation0]]
  $region73: #{tpu_custom_call.1} parent=0
    _
  %s10 = ssub.s32 1, %s8
  %s11 = scalar_select 0, %s10, %s8
  $region1: #{tpu_custom_call.1} parent=0
    #allocation2 [shape = 'u8[512]{0}', space=smem, size = 0x200, scoped, tag = 'input window, operand 0, single buffered']
    #allocation3 [shape = 's32[2]{0}', space=sflag, size = 0x8, scoped, tag = 'scoped memory for tpu_custom_call.1']
    #allocation4 [shape = 's32[2]{0}', space=sflag, size = 0x8, scoped, tag = 'scoped memory for tpu_custom_call.1']
    #allocation5 [shape = 's32[2]{0}', space=sflag, size = 0x8, scoped, tag = 'scoped memory for tpu_custom_call.1']
    #allocation6 [shape = 'u8[512]{0}', space=smem, size = 0x200, scoped, tag = 'input window, operand 1, single buffered']
    #allocation7 [shape = 's32[1]{0}', space=sflag, size = 0x4, scoped, tag = 'scoped memory for tpu_custom_call.1']
    #allocation8 [shape = 'u8[16384]{0}', space=vmem, size = 0x4000, scoped, tag = 'input window, operand 2']
    #allocation9 [shape = 'u8[32768]{0}', space=vmem, size = 0x8000, scoped, tag = 'output window, operand 0']
    %12 = vsyncpa [#allocation5], 0
    %13 = vsyncpa [#allocation7], 0
    %14 = vsyncpa [#allocation3], 0
    %s15 = scalar_lea.sflag [#allocation3], 1
    %16 = vsyncpa %s15, 0
    %17 = vsyncpa [#allocation4], 0
    %s18 = scalar_lea.sflag [#allocation4], 1
    %19 = vsyncpa %s18, 0
    loop: start=0, step=1, limit=8
    $region2: #{tpu_custom_call.1} parent=1 // loop_pre_header
      _
    $region3: #{tpu_custom_call.1} parent=1 // loop_header
      %s21 = sphi 0, %s25
      %p22 = scmp.ge.s32.totalorder %s21, 8
      %s28 = sphi 0, %s47
      %s29 = sphi 0, %s43
      %s30 = sphi 0, %s39
      %s31 = sphi 0, %s28
      %s32 = sphi 0, %s29
      %s33 = sphi 0, %s30
      %s34 = sphi 0, %s31
      %s35 = sphi 0, %s32
      %s36 = sphi 0, %s33
      %s48 = sphi 0, %s48
      %s50 = sphi 0, %s48
      %s51 = sphi 0, %s50
      %s65 = sphi 0, %s51
      %s69 = sphi 0, %s69
      %s71 = sphi 0, %s69
      %s72 = sphi 0, %s71
      %s86 = sphi 0, %s72
      %s94 = sphi 0, %s96
      %s97 = sphi 0, %s94
      %s98 = sphi 0, %s97
      %s114 = sphi 0, %s98
      %s120 = sphi 0, %s122
      %s123 = sphi 0, %s120
      %s124 = sphi 0, %s123
      %s140 = sphi 0, %s124
      %s144 = sphi 0, %s144
      %s146 = sphi 0, %s144
      %s147 = sphi 0, %s146
      %s161 = sphi 0, %s147
      %s167 = sphi 0, %s169
      %s170 = sphi 0, %s167
      %s171 = sphi 0, %s170
      %s187 = sphi 0, %s171
      %s191 = sphi 0, %s191
      %s193 = sphi 0, %s191
      %s194 = sphi 0, %s193
      %s208 = sphi 0, %s194
      %s218 = sphi 0, %s220
      %s221 = sphi 0, %s218
      %s222 = sphi 0, %s221
      %s238 = sphi 0, %s222
    $region4: #{tpu_custom_call.1} parent=1 // loop_header_branch
      %24 = sbr.rel (%p22) target = $region8
    $region5: #{tpu_custom_call.1} parent=1 // loop_body
      %s26 = ssub.s32 %s21, 1
      %s27 = ssub.s32 %s21, 2
      %s37 = sadd.s32 1, %s30
      %p38 = scmp.ge.s32.totalorder %s37, 1
      %s39 = scalar_select %p38, 0, %s37
      %s40 = sadd.s32 1, %s29
      %s41 = scalar_select %p38, %s40, %s29
      %p42 = scmp.ge.s32.totalorder %s41, 3
      %s43 = scalar_select %p42, 0, %s41
      %s44 = sadd.s32 1, %s28
      %s45 = scalar_select %p42, %s44, %s28
      %p46 = scmp.ge.s32.totalorder %s45, 2
      %s47 = scalar_select %p46, 0, %s45
      %s49 = sadd.s32 %s48, 1
      %p52 = scmp.eq.s32.totalorder %s21, 5
      %p53 = scmp.ne.s32.totalorder %s48, %s50
      %p54 = scmp.eq.s32.totalorder %s21, 0
      %p55 = por %p53, %p54
      %p56 = scmp.ne.s32.totalorder %s48, %s50
      %p57 = scmp.eq.s32.totalorder %s26, 5
      %p58 = por %p56, %p57
      %p59 = scmp.ne.s32.totalorder %s50, %s51
      %p60 = scmp.eq.s32.totalorder %s26, 0
      %p61 = por %p59, %p60
      %p62 = scmp.ne.s32.totalorder %s50, %s51
      %p63 = scmp.eq.s32.totalorder %s27, 5
      %p64 = por %p62, %p63
      %p66 = scmp.ne.s32.totalorder %s51, %s65
      %p67 = scmp.eq.s32.totalorder %s27, 0
      %p68 = por %p66, %p67
      %s70 = sadd.s32 %s69, 1
      %p73 = scmp.eq.s32.totalorder %s21, 5
      %p74 = scmp.ne.s32.totalorder %s69, %s71
      %p75 = scmp.eq.s32.totalorder %s21, 0
      %p76 = por %p74, %p75
      %p77 = scmp.ne.s32.totalorder %s69, %s71
      %p78 = scmp.eq.s32.totalorder %s26, 5
      %p79 = por %p77, %p78
      %p80 = scmp.ne.s32.totalorder %s71, %s72
      %p81 = scmp.eq.s32.totalorder %s26, 0
      %p82 = por %p80, %p81
      %p83 = scmp.ne.s32.totalorder %s71, %s72
      %p84 = scmp.eq.s32.totalorder %s27, 5
      %p85 = por %p83, %p84
      %p87 = scmp.ne.s32.totalorder %s72, %s86
      %p88 = scmp.eq.s32.totalorder %s27, 0
      %p89 = por %p87, %p88
      %s90 = ssub.s32 %s28, %s47
      %s91 = ssub.s32 %s29, %s43
      %s92 = sor.u32 %s90, %s91
      %p93 = scmp.eq.s32.totalorder %s92, 0
      %s95 = sadd.s32 %s94, 1
      %s96 = scalar_select %p93, %s94, %s95
      %p99 = pneg %p93
      %p100 = scmp.eq.s32.totalorder %s21, 5
      %p101 = por %p99, %p100
      %p102 = scmp.ne.s32.totalorder %s94, %s97
      %p103 = scmp.eq.s32.totalorder %s21, 0
      %p104 = por %p102, %p103
      %p105 = scmp.ne.s32.totalorder %s94, %s97
      %p106 = scmp.eq.s32.totalorder %s26, 5
      %p107 = por %p105, %p106
      %p108 = scmp.ne.s32.totalorder %s97, %s98
      %p109 = scmp.eq.s32.totalorder %s26, 0
      %p110 = por %p108, %p109
      %p111 = scmp.ne.s32.totalorder %s97, %s98
      %p112 = scmp.eq.s32.totalorder %s27, 5
      %p113 = por %p111, %p112
      %p115 = scmp.ne.s32.totalorder %s98, %s114
      %p116 = scmp.eq.s32.totalorder %s27, 0
      %p117 = por %p115, %p116
      %s118 = ssub.s32 %s30, %s39
      %p119 = scmp.eq.s32.totalorder %s118, 0
      %s121 = sadd.s32 %s120, 1
      %s122 = scalar_select %p119, %s120, %s121
      %p125 = pneg %p119
      %p126 = scmp.eq.s32.totalorder %s21, 5
      %p127 = por %p125, %p126
      %p128 = scmp.ne.s32.totalorder %s120, %s123
      %p129 = scmp.eq.s32.totalorder %s21, 0
      %p130 = por %p128, %p129
      %p131 = scmp.ne.s32.totalorder %s120, %s123
      %p132 = scmp.eq.s32.totalorder %s26, 5
      %p133 = por %p131, %p132
      %p134 = scmp.ne.s32.totalorder %s123, %s124
      %p135 = scmp.eq.s32.totalorder %s26, 0
      %p136 = por %p134, %p135
      %p137 = scmp.ne.s32.totalorder %s123, %s124
      %p138 = scmp.eq.s32.totalorder %s27, 5
      %p139 = por %p137, %p138
      %p141 = scmp.ne.s32.totalorder %s124, %s140
      %p142 = scmp.eq.s32.totalorder %s27, 0
      %p143 = por %p141, %p142
      %s145 = sadd.s32 %s144, 1
      %p148 = scmp.eq.s32.totalorder %s21, 5
      %p149 = scmp.ne.s32.totalorder %s144, %s146
      %p150 = scmp.eq.s32.totalorder %s21, 0
      %p151 = por %p149, %p150
      %p152 = scmp.ne.s32.totalorder %s144, %s146
      %p153 = scmp.eq.s32.totalorder %s26, 5
      %p154 = por %p152, %p153
      %p155 = scmp.ne.s32.totalorder %s146, %s147
      %p156 = scmp.eq.s32.totalorder %s26, 0
      %p157 = por %p155, %p156
      %p158 = scmp.ne.s32.totalorder %s146, %s147
      %p159 = scmp.eq.s32.totalorder %s27, 5
      %p160 = por %p158, %p159
      %p162 = scmp.ne.s32.totalorder %s147, %s161
      %p163 = scmp.eq.s32.totalorder %s27, 0
      %p164 = por %p162, %p163
      %s165 = ssub.s32 %s30, %s39
      %p166 = scmp.eq.s32.totalorder %s165, 0
      %s168 = sadd.s32 %s167, 1
      %s169 = scalar_select %p166, %s167, %s168
      %p172 = pneg %p166
      %p173 = scmp.eq.s32.totalorder %s21, 5
      %p174 = por %p172, %p173
      %p175 = scmp.ne.s32.totalorder %s167, %s170
      %p176 = scmp.eq.s32.totalorder %s21, 0
      %p177 = por %p175, %p176
      %p178 = scmp.ne.s32.totalorder %s167, %s170
      %p179 = scmp.eq.s32.totalorder %s26, 5
      %p180 = por %p178, %p179
      %p181 = scmp.ne.s32.totalorder %s170, %s171
      %p182 = scmp.eq.s32.totalorder %s26, 0
      %p183 = por %p181, %p182
      %p184 = scmp.ne.s32.totalorder %s170, %s171
      %p185 = scmp.eq.s32.totalorder %s27, 5
      %p186 = por %p184, %p185
      %p188 = scmp.ne.s32.totalorder %s171, %s187
      %p189 = scmp.eq.s32.totalorder %s27, 0
      %p190 = por %p188, %p189
      %s192 = sadd.s32 %s191, 1
      %p195 = scmp.eq.s32.totalorder %s21, 5
      %p196 = scmp.ne.s32.totalorder %s191, %s193
      %p197 = scmp.eq.s32.totalorder %s21, 0
      %p198 = por %p196, %p197
      %p199 = scmp.ne.s32.totalorder %s191, %s193
      %p200 = scmp.eq.s32.totalorder %s26, 5
      %p201 = por %p199, %p200
      %p202 = scmp.ne.s32.totalorder %s193, %s194
      %p203 = scmp.eq.s32.totalorder %s26, 0
      %p204 = por %p202, %p203
      %p205 = scmp.ne.s32.totalorder %s193, %s194
      %p206 = scmp.eq.s32.totalorder %s27, 5
      %p207 = por %p205, %p206
      %p209 = scmp.ne.s32.totalorder %s194, %s208
      %p210 = scmp.eq.s32.totalorder %s27, 0
      %p211 = por %p209, %p210
      %s212 = ssub.s32 %s28, %s47
      %s213 = ssub.s32 %s29, %s43
      %s214 = sor.u32 %s212, %s213
      %s215 = ssub.s32 %s30, %s39
      %s216 = sor.u32 %s214, %s215
      %p217 = scmp.eq.s32.totalorder %s216, 0
      %s219 = sadd.s32 %s218, 1
      %s220 = scalar_select %p217, %s218, %s219
      %p223 = pneg %p217
      %p224 = scmp.eq.s32.totalorder %s21, 5
      %p225 = por %p223, %p224
      %p226 = scmp.ne.s32.totalorder %s218, %s221
      %p227 = scmp.eq.s32.totalorder %s21, 0
      %p228 = por %p226, %p227
      %p229 = scmp.ne.s32.totalorder %s218, %s221
      %p230 = scmp.eq.s32.totalorder %s26, 5
      %p231 = por %p229, %p230
      %p232 = scmp.ne.s32.totalorder %s221, %s222
      %p233 = scmp.eq.s32.totalorder %s26, 0
      %p234 = por %p232, %p233
      %p235 = scmp.ne.s32.totalorder %s221, %s222
      %p236 = scmp.eq.s32.totalorder %s27, 5
      %p237 = por %p235, %p236
      %p239 = scmp.ne.s32.totalorder %s222, %s238
      %p240 = scmp.eq.s32.totalorder %s27, 0
      %p241 = por %p239, %p240
      %p242 = scmp.le.s32.totalorder 1, %s21
      %p243 = scmp.lt.s32.totalorder %s21, 7
      %p244 = pnand %p242, %p243
      %p245 = pneg %p244
      // Predicated region
      $region9: #{tpu_custom_call.1} parent=5 // pred_check
        _
      $region10: #{tpu_custom_call.1} parent=5 // pred_check_branch
        %247 = sbr.rel (%p244) target = $region12
      $region11: #{tpu_custom_call.1} parent=5 // pred_region
        %s248 = ssub.s32 %s21, 1
        // Predicated region
        $region13: #{tpu_custom_call.1} parent=11 // pred_check
          %p249 = pneg %p61
        $region14: #{tpu_custom_call.1} parent=11 // pred_check_branch
          %251 = sbr.rel (%p249) target = $region16
        $region15: #{tpu_custom_call.1} parent=11 // pred_region
          %s253 = ssub.s32 16, 16
          %254 = vsyncadd [#allocation5], %s253
          %s256 = sshll.u32 %s0, 4
          %s257 = int_to_ptr.vmem [resolvable:$true] %s256
          %259 = dma.vmem_to_smem %s257, 16, [#allocation2], [#allocation5]
        $region16: #{tpu_custom_call.1} parent=11 // pred_fallthru
          _
        // Predicated region
        $region17: #{tpu_custom_call.1} parent=11 // pred_check
          %p260 = pneg %p82
        $region18: #{tpu_custom_call.1} parent=11 // pred_check_branch
          %262 = sbr.rel (%p260) target = $region20
        $region19: #{tpu_custom_call.1} parent=11 // pred_region
          %s264 = ssub.s32 16, 16
          %265 = vsyncadd [#allocation7], %s264
          %s267 = sshll.u32 %s1, 4
          %s268 = int_to_ptr.vmem [resolvable:$true] %s267
          %270 = dma.vmem_to_smem %s268, 16, [#allocation6], [#allocation7]
        $region20: #{tpu_custom_call.1} parent=11 // pred_fallthru
          _
        // Predicated region
        $region21: #{tpu_custom_call.1} parent=11 // pred_check
          %p271 = pneg %p136
        $region22: #{tpu_custom_call.1} parent=11 // pred_check_branch
          %273 = sbr.rel (%p271) target = $region24
        $region23: #{tpu_custom_call.1} parent=11 // pred_region
          %s274 = smul.u32 4, %s33
          %p275 = scmp.lt.s32.totalorder %s274, 3
          %s276 = scalar_select %p275, %s274, 3
          %s277 = smul.addr %s276, 4
          %s278 = scalar_lea.vmem %s3, %s277
          %s279 = smul.u32 4, %s33
        $region24: #{tpu_custom_call.1} parent=11 // pred_fallthru
          _
        // Predicated region
        $region25: #{tpu_custom_call.1} parent=11 // pred_check
          %p280 = pneg %p157
        $region26: #{tpu_custom_call.1} parent=11 // pred_check_branch
          %282 = sbr.rel (%p280) target = $region28
        $region27: #{tpu_custom_call.1} parent=11 // pred_region
          _
        $region28: #{tpu_custom_call.1} parent=11 // pred_fallthru
          _
        // Predicated region
        $region29: #{tpu_custom_call.1} parent=11 // pred_check
          %p283 = pneg %p183
        $region30: #{tpu_custom_call.1} parent=11 // pred_check_branch
          %285 = sbr.rel (%p283) target = $region32
        $region31: #{tpu_custom_call.1} parent=11 // pred_region
          %s286 = smul.u32 4, %s33
          %p287 = scmp.lt.s32.totalorder %s286, 3
          %s288 = scalar_select %p287, %s286, 3
          %s289 = smul.addr %s288, 8
          %s290 = scalar_lea.vmem %s5, %s289
          %s291 = smul.u32 4, %s33
        $region32: #{tpu_custom_call.1} parent=11 // pred_fallthru
          _
        // Predicated region
        $region33: #{tpu_custom_call.1} parent=11 // pred_check
          %p292 = pneg %p204
        $region34: #{tpu_custom_call.1} parent=11 // pred_check_branch
          %294 = sbr.rel (%p292) target = $region36
        $region35: #{tpu_custom_call.1} parent=11 // pred_region
          _
        $region36: #{tpu_custom_call.1} parent=11 // pred_fallthru
          _
      $region12: #{tpu_custom_call.1} parent=5 // pred_fallthru
        _
      %p295 = scmp.lt.s32.totalorder %s21, 6
      // Predicated region
      $region37: #{tpu_custom_call.1} parent=5 // pred_check
        %p296 = pneg %p295
      $region38: #{tpu_custom_call.1} parent=5 // pred_check_branch
        %298 = sbr.rel (%p296) target = $region40
      $region39: #{tpu_custom_call.1} parent=5 // pred_region
        // Predicated region
        $region41: #{tpu_custom_call.1} parent=39 // pred_check
          %p299 = pneg %p104
        $region42: #{tpu_custom_call.1} parent=39 // pred_check_branch
          %301 = sbr.rel (%p299) target = $region44
        $region43: #{tpu_custom_call.1} parent=39 // pred_region
          %s302 = sand.u32 %s94, 1
          %s303 = scalar_lea.sflag [#allocation3], %s302
          %s304 = sand.u32 %s94, 1
          %s305 = smul.addr %s304, 16
          %s306 = scalar_lea.vmem [#allocation8], %s305
          %s308 = ssub.s32 256, 256
          %309 = vsyncadd %s303, %s308
          %s310 = smul.addr %s29, 2
          %s311 = smul.addr %s28, 6
          %s312 = sadd.s32 %s310, %s311
          %s313 = smul.addr %s312, 128
          %s314 = scalar_lea.hbm %s2, %s313
          %s315 = sshll.u32 %s306, 4
          %s316 = int_to_ptr.vmem [resolvable:$true] %s315
          %321 = dma.hbm_to_vmem [thread:$0]  %s314, 256, %s316, %s303, 128, 128, 8
        $region44: #{tpu_custom_call.1} parent=39 // pred_fallthru
          _
      $region40: #{tpu_custom_call.1} parent=5 // pred_fallthru
        _
      %p322 = scmp.le.s32.totalorder 1, %s21
      %p323 = scmp.lt.s32.totalorder %s21, 7
      %p324 = pnand %p322, %p323
      %p325 = pneg %p324
      // Predicated region
      $region45: #{tpu_custom_call.1} parent=5 // pred_check
        _
      $region46: #{tpu_custom_call.1} parent=5 // pred_check_branch
        %327 = sbr.rel (%p324) target = $region48
      $region47: #{tpu_custom_call.1} parent=5 // pred_region
        %s328 = ssub.s32 %s21, 1
        // Predicated region
        $region49: #{tpu_custom_call.1} parent=47 // pred_check
          %p329 = pneg %p61
        $region50: #{tpu_custom_call.1} parent=47 // pred_check_branch
          %331 = sbr.rel (%p329) target = $region52
        $region51: #{tpu_custom_call.1} parent=47 // pred_region
          %332 = dma.done [#allocation5], 16
        $region52: #{tpu_custom_call.1} parent=47 // pred_fallthru
          _
        // Predicated region
        $region53: #{tpu_custom_call.1} parent=47 // pred_check
          %p333 = pneg %p82
        $region54: #{tpu_custom_call.1} parent=47 // pred_check_branch
          %335 = sbr.rel (%p333) target = $region56
        $region55: #{tpu_custom_call.1} parent=47 // pred_region
          %336 = dma.done [#allocation7], 16
        $region56: #{tpu_custom_call.1} parent=47 // pred_fallthru
          _
        %s337 = sand.u32 %s97, 1
        %s338 = scalar_lea.sflag [#allocation3], %s337
        %s339 = sand.u32 %s97, 1
        %s340 = smul.addr %s339, 16
        %s341 = scalar_lea.vmem [#allocation8], %s340
        // Predicated region
        $region57: #{tpu_custom_call.1} parent=47 // pred_check
          %p342 = pneg %p110
        $region58: #{tpu_custom_call.1} parent=47 // pred_check_branch
          %344 = sbr.rel (%p342) target = $region60
        $region59: #{tpu_custom_call.1} parent=47 // pred_region
          %345 = dma.done %s338, 256
        $region60: #{tpu_custom_call.1} parent=47 // pred_fallthru
          _
        %346 = sfence
        %p347 = pneg %p61
        %p348 = pneg %p58
        %p349 = pneg %p82
        %p350 = pneg %p79
        %s351 = sand.u32 %s97, 1
        %s352 = scalar_lea.sflag [#allocation3], %s351
        %s353 = sand.u32 %s97, 1
        %s354 = smul.addr %s353, 16
        %s355 = scalar_lea.vmem [#allocation8], %s354
        %p356 = pneg %p110
        %p357 = pneg %p107
        %s358 = smul.u32 4, %s33
        %p359 = scmp.lt.s32.totalorder %s358, 3
        %s360 = scalar_select %p359, %s358, 3
        %s361 = smul.addr %s360, 4
        %s362 = scalar_lea.vmem %s3, %s361
        %p363 = pneg %p136
        %p364 = pneg %p133
        %p365 = pneg %p157
        %p366 = pneg %p154
        %s367 = smul.u32 4, %s33
        %p368 = scmp.lt.s32.totalorder %s367, 3
        %s369 = scalar_select %p368, %s367, 3
        %s370 = smul.addr %s369, 8
        %s371 = scalar_lea.vmem %s5, %s370
        %p372 = pneg %p183
        %p373 = pneg %p180
        %p374 = pneg %p204
        %p375 = pneg %p201
        %p376 = pneg %p234
        %p377 = pneg %p231
        %s378 = sand.u32 %s221, 1
        %s379 = scalar_lea.sflag [#allocation4], %s378
        %s380 = sand.u32 %s221, 1
        %s381 = smul.addr %s380, 32
        %s382 = scalar_lea.vmem [#allocation9], %s381
        %s383 = smul.u32 4, %s33
        %p384 = scmp.lt.s32.totalorder %s383, 3
        %s385 = scalar_select %p384, %s383, 3
        %s386 = smul.addr %s385, 4
        %s387 = scalar_lea.vmem %s3, %s386
        %s388 = smul.u32 4, %s33
        %s389 = smul.u32 4, %s33
        %p390 = scmp.lt.s32.totalorder %s389, 3
        %s391 = scalar_select %p390, %s389, 3
        %s392 = smul.addr %s391, 8
        %s393 = scalar_lea.vmem %s5, %s392
        %s394 = smul.u32 4, %s33
        %s395 = smul.u32 4, %s33
        %s397 = sld [smem:[#allocation2 + %s32]]
        %s398 = sld [smem:[#allocation6 + %s32]]
        %v399 = vld [vmem:[%s341] sm:$0xff]
        %v400 = vld [vmem:[%s341 + $0x8] sm:$0xff]
        %v401 = vpack.c.bf16 %v400, %v399
        %v402 = vld [vmem:[%s387] sm:$0xf]
        %v403 = vld [vmem:[%s387 + $0x4] sm:$0xf]
        %v404 = vld [vmem:[%s387 + $0x8] sm:$0xf]
        %v405 = vld [vmem:[%s387 + $0xc] sm:$0xf]
        %v410 = vunpack.c.l.b16 %v402
        %v411 = vunpack.c.l.b16 %v403
        %v412 = vunpack.c.l.b16 %v404
        %v413 = vunpack.c.l.b16 %v405
        %v414 = vpack.c.b16 %v411, %v410
        %v415 = vpack.c.b16 %v413, %v412
        %vm416 = vcmask 130048
        %v418 = vsel %vm416, %v414, 0
        %v421 = vsel %vm416, %v415, 0
        %423 = vmatprep.subr.bf16.mxu0 0
        %424 = vmatpush1.bf16.msra.mxu0 %v401
        %425 = vmatprep.subr.bf16.mxu0 0
        %426 = vmatpush1.bf16.msra.mxu0 0
        %427 = vmatprep.subr.bf16.mxu0 0
        %428 = vmatpush1.bf16.msra.mxu0 0
        %429 = vmatprep.subr.bf16.mxu0 0
        %430 = vmatpush1.bf16.msra.mxu0 0
        %431 = vmatprep.subr.bf16.mxu0 0
        %432 = vmatpush1.bf16.msra.mxu0 0
        %433 = vmatprep.subr.bf16.mxu0 0
        %434 = vmatpush1.bf16.msra.mxu0 0
        %435 = vmatprep.subr.bf16.mxu0 0
        %436 = vmatpush1.bf16.msra.mxu0 0
        %437 = vmatprep.subr.bf16.mxu0 0
        %438 = vmatpush1.bf16.msra.mxu0 0
        %439 = vmatprep.subr.bf16.mxu0 0
        %440 = vmatpush1.bf16.msra.mxu0 0
        %441 = vmatprep.subr.bf16.mxu0 0
        %442 = vmatpush1.bf16.msra.mxu0 0
        %443 = vmatprep.subr.bf16.mxu0 0
        %444 = vmatpush1.bf16.msra.mxu0 0
        %445 = vmatprep.subr.bf16.mxu0 0
        %446 = vmatpush1.bf16.msra.mxu0 0
        %447 = vmatprep.subr.bf16.mxu0 0
        %448 = vmatpush1.bf16.msra.mxu0 0
        %449 = vmatprep.subr.bf16.mxu0 0
        %450 = vmatpush1.bf16.msra.mxu0 0
        %451 = vmatprep.subr.bf16.mxu0 0
        %452 = vmatpush1.bf16.msra.mxu0 0
        %453 = vmatprep.subr.bf16.mxu0 0
        %454 = vmatpush1.bf16.msra.mxu0 0
        %455 = vmatprep.mubr.bf16.mxu0 0
        %456 = vmatmul.mubr.bf16.gmra.mrb[0].mxu0 %v418
        %v457 = vpop.f32.mrb[0].mxu0
        %v458 = vadd.f32 0.0, %v457
        %v459 = vpop.f32.mrb[0].mxu0
        %v460 = vpop.f32.mrb[0].mxu0
        %v461 = vadd.f32 0.0, %v460
        %v462 = vpop.f32.mrb[0].mxu0
        %463 = vmatprep.mubr.bf16.mxu0 0
        %464 = vmatmul.mubr.bf16.gmra.mrb[0].mxu0 %v421
        %v465 = vpop.f32.mrb[0].mxu0
        %v466 = vadd.f32 0.0, %v465
        %v467 = vpop.f32.mrb[0].mxu0
        %v468 = vpop.f32.mrb[0].mxu0
        %v469 = vadd.f32 0.0, %v468
        %v470 = vpop.f32.mrb[0].mxu0
        %471 = vdwg.mxu0
        %v472 = vpack.c.bf16 %v461, %v458
        %v473 = vpack.c.bf16 %v469, %v466
        %v474 = vld [vmem:[%s4] sm:$0xf]
        %v475 = vld [vmem:[%s4 + $0x4] sm:$0xf]
        %v478 = vunpack.c.l.b16 %v474
        %v479 = vunpack.c.l.b16 %v475
        %v480 = vpack.c.b16 %v479, %v478
        %v483 = vsel %vm416, %v472, 0
        %v486 = vsel %vm416, %v473, 0
        %488 = vmatprep.subr.bf16.mxu0 0
        %489 = vmatpush1.bf16.msra.mxu0 %v480
        %490 = vmatprep.subr.bf16.mxu0 0
        %491 = vmatpush1.bf16.msra.mxu0 0
        %492 = vmatprep.subr.bf16.mxu0 0
        %493 = vmatpush1.bf16.msra.mxu0 0
        %494 = vmatprep.subr.bf16.mxu0 0
        %495 = vmatpush1.bf16.msra.mxu0 0
        %496 = vmatprep.subr.bf16.mxu0 0
        %497 = vmatpush1.bf16.msra.mxu0 0
        %498 = vmatprep.subr.bf16.mxu0 0
        %499 = vmatpush1.bf16.msra.mxu0 0
        %500 = vmatprep.subr.bf16.mxu0 0
        %501 = vmatpush1.bf16.msra.mxu0 0
        %502 = vmatprep.subr.bf16.mxu0 0
        %503 = vmatpush1.bf16.msra.mxu0 0
        %504 = vmatprep.subr.bf16.mxu0 0
        %505 = vmatpush1.bf16.msra.mxu0 0
        %506 = vmatprep.subr.bf16.mxu0 0
        %507 = vmatpush1.bf16.msra.mxu0 0
        %508 = vmatprep.subr.bf16.mxu0 0
        %509 = vmatpush1.bf16.msra.mxu0 0
        %510 = vmatprep.subr.bf16.mxu0 0
        %511 = vmatpush1.bf16.msra.mxu0 0
        %512 = vmatprep.subr.bf16.mxu0 0
        %513 = vmatpush1.bf16.msra.mxu0 0
        %514 = vmatprep.subr.bf16.mxu0 0
        %515 = vmatpush1.bf16.msra.mxu0 0
        %516 = vmatprep.subr.bf16.mxu0 0
        %517 = vmatpush1.bf16.msra.mxu0 0
        %518 = vmatprep.subr.bf16.mxu0 0
        %519 = vmatpush1.bf16.msra.mxu0 0
        %520 = vmatprep.mubr.bf16.mxu0 0
        %521 = vmatmul.mubr.bf16.gmra.mrb[0].mxu0 %v483
        %v522 = vpop.f32.mrb[0].mxu0
        %v523 = vadd.f32 0.0, %v522
        %v524 = vpop.f32.mrb[0].mxu0
        %v525 = vpop.f32.mrb[0].mxu0
        %v526 = vadd.f32 0.0, %v525
        %v527 = vpop.f32.mrb[0].mxu0
        %528 = vmatprep.mubr.bf16.mxu0 0
        %529 = vmatmul.mubr.bf16.gmra.mrb[0].mxu0 %v486
        %v530 = vpop.f32.mrb[0].mxu0
        %v531 = vadd.f32 0.0, %v530
        %v532 = vpop.f32.mrb[0].mxu0
        %v533 = vpop.f32.mrb[0].mxu0
        %v534 = vadd.f32 0.0, %v533
        %v535 = vpop.f32.mrb[0].mxu0
        %536 = vdwg.mxu0
        %v537 = vld [vmem:[%s393] sm:$0xff]
        %v538 = vld [vmem:[%s393 + $0x8] sm:$0xff]
        %v539 = vld [vmem:[%s393 + $0x10] sm:$0xff]
        %v540 = vld [vmem:[%s393 + $0x18] sm:$0xff]
        %v541 = vld [vmem:[%s6] sm:$0x1]
        %543 = vset.pattern.permute.xlu0 0
        %544 = vperm.xlu0 %543, %v537
        %v545 = vpop.permute.xlu0 %544
        %548 = vset.pattern.permute.xlu0 0
        %549 = vperm.xlu0 %548, %v538
        %v550 = vpop.permute.xlu0 %549
        %553 = vset.pattern.permute.xlu0 0
        %554 = vperm.xlu0 %553, %v539
        %v555 = vpop.permute.xlu0 %554
        %558 = vset.pattern.permute.xlu0 0
        %559 = vperm.xlu0 %558, %v540
        %v560 = vpop.permute.xlu0 %559
        %v563 = vlaneseq
        %v564 = vshrl.u32 %v563, 7
        %v565 = vsub.s32 0, %v564
        %v566 = vrot.slane %v541, %v565
        %v568 = vmul.f32 %v545, %v566
        %v569 = vmul.f32 %v550, %v566
        %v570 = vmul.f32 %v555, %v566
        %v571 = vmul.f32 %v560, %v566
        %v572 = vstv %s397
        %v573 = vmul.f32 %v523, %v572
        %v574 = vmul.f32 %v526, %v572
        %v575 = vmul.f32 %v531, %v572
        %v576 = vmul.f32 %v534, %v572
        %v577 = vstv %s398
        %v578 = vmul.f32 %v577, %v568
        %v579 = vmul.f32 %v577, %v569
        %v580 = vmul.f32 %v577, %v570
        %v581 = vmul.f32 %v577, %v571
        %v582 = vsub.f32 %v573, %v578
        %v583 = vsub.f32 %v574, %v579
        %v584 = vsub.f32 %v575, %v580
        %v585 = vsub.f32 %v576, %v581
        %vm586 = vcmask 261120
        %587 = vst.msk [vmem:[%s382] sm:$0xff] %vm586, %v582
        %588 = vst.msk [vmem:[%s382 + $0x8] sm:$0xff] %vm586, %v583
        %589 = vst.msk [vmem:[%s382 + $0x10] sm:$0xff] %vm586, %v584
        %590 = vst.msk [vmem:[%s382 + $0x18] sm:$0xff] %vm586, %v585
        %s591 = sand.u32 %s221, 1
        %s592 = scalar_lea.sflag [#allocation4], %s591
        %s593 = sand.u32 %s221, 1
        %s594 = smul.addr %s593, 32
        %s595 = scalar_lea.vmem [#allocation9], %s594
        // Predicated region
        $region61: #{tpu_custom_call.1} parent=47 // pred_check
          %p596 = pneg %p231
        $region62: #{tpu_custom_call.1} parent=47 // pred_check_branch
          %598 = sbr.rel (%p596) target = $region64
        $region63: #{tpu_custom_call.1} parent=47 // pred_region
          %s599 = smul.u32 4, %s33
          %s601 = ssub.s32 512, 512
          %602 = vsyncadd %s592, %s601
          %s603 = smul.addr %s32, 4
          %s604 = sadd.s32 %s599, %s603
          %s605 = smul.addr %s31, 12
          %s606 = sadd.s32 %s604, %s605
          %s607 = smul.addr %s606, 128
          %s608 = scalar_lea.hbm %s7, %s607
          %s609 = sshll.u32 %s595, 4
          %s610 = int_to_ptr.vmem [resolvable:$true] %s609
          %615 = dma.vmem_to_hbm [thread:$0]  %s610, 512, %s608, %s592, 128, 128, 8
        $region64: #{tpu_custom_call.1} parent=47 // pred_fallthru
          _
      $region48: #{tpu_custom_call.1} parent=5 // pred_fallthru
        _
      %p616 = scmp.le.s32.totalorder 2, %s21
      // Predicated region
      $region65: #{tpu_custom_call.1} parent=5 // pred_check
        %p617 = pneg %p616
      $region66: #{tpu_custom_call.1} parent=5 // pred_check_branch
        %619 = sbr.rel (%p617) target = $region68
      $region67: #{tpu_custom_call.1} parent=5 // pred_region
        %s620 = ssub.s32 %s21, 2
        // Predicated region
        $region69: #{tpu_custom_call.1} parent=67 // pred_check
          %p621 = pneg %p237
        $region70: #{tpu_custom_call.1} parent=67 // pred_check_branch
          %623 = sbr.rel (%p621) target = $region72
        $region71: #{tpu_custom_call.1} parent=67 // pred_region
          %s624 = sand.u32 %s222, 1
          %s625 = scalar_lea.sflag [#allocation4], %s624
          %s626 = sand.u32 %s222, 1
          %s627 = smul.addr %s626, 32
          %s628 = scalar_lea.vmem [#allocation9], %s627
          %629 = dma.done %s625, 512
        $region72: #{tpu_custom_call.1} parent=67 // pred_fallthru
          _
      $region68: #{tpu_custom_call.1} parent=5 // pred_fallthru
        _
    $region6: #{tpu_custom_call.1} parent=1 // loop_footer
      %s25 = sadd.s32 1, %s21
    $region7: #{tpu_custom_call.1} parent=1 // loop_footer_branch
      %20 = sbr.rel target = $region3
    $region8: #{tpu_custom_call.1} parent=1 // loop_exit
      _
    %630 = vsyncpa [#allocation3], 1
    %s631 = scalar_lea.sflag [#allocation3], 1
    %632 = vsyncpa %s631, 1
    %633 = vsyncpa [#allocation4], 1
    %s634 = scalar_lea.sflag [#allocation4], 1
    %635 = vsyncpa %s634, 1
    %636 = vsyncpa [#allocation5], 1
    %s637 = scalar_lea.sflag [#allocation5], 1
    %638 = vsyncpa %s637, 1
    %639 = vsyncpa [#allocation7], 1

</llo_original>
